<compile_context>
chip_gen: v5e
topology: v5e:2x2
jax: 0.10.0
libtpu: 0.0.40
codegen_flags: <defaults>
</compile_context>

<pallas_src>
import functools

import jax
import jax.numpy as jnp
from jax import lax
from jax.experimental import pallas as pl
from jax.experimental.pallas import tpu as pltpu


def _round_up(x, m):
    return ((x + m - 1) // m) * m


# --------------------------------------------------------------------------- #
# Phase 1: energy accumulation over HW tiles, softmax, W_eff = w2 @ attn^T
# --------------------------------------------------------------------------- #
def _dfe_phase1_kernel(c_true, feat_ref, coarse_ref, w1_ref, b1_ref, w2_ref,
                       weff_ref, energy_acc):
    # feat_ref:   (Cin_p, T)  bf16    coarse_ref: (D_p, T)  bf16
    # w1_ref:     (C_p, Cin_p) bf16   b1_ref: (C_p, 1) f32  (BN folded)
    # w2_ref:     (C_p, C_p)  f32
    # weff_ref:   (C_p, D_p)  bf16 output (per batch element)
    # energy_acc: (D_p, C_p)  f32 VMEM scratch
    t = pl.program_id(1)

    @pl.when(t == 0)
    def _():
        energy_acc[...] = jnp.zeros_like(energy_acc)

    # conv1 (1x1, no bias) + folded BatchNorm + ReLU.  Dropout2d: identity (eval).
    f = jnp.dot(w1_ref[...], feat_ref[...],
                preferred_element_type=jnp.float32) + b1_ref[...]     # (C_p, T) f32
    f = jnp.maximum(f, 0.0).astype(jnp.bfloat16)

    # energy += coarse_tile @ f^T : (D_p, T) x (T, C_p) -> (D_p, C_p), f32 acc.
    energy_acc[...] += lax.dot_general(
        coarse_ref[...], f, (((1,), (1,)), ((), ())),
        preferred_element_type=jnp.float32)

    @pl.when(t == pl.num_programs(1) - 1)
    def _():
        energy = energy_acc[...]                                      # (D_p, C_p)
        d_pad, c_pad = energy.shape
        if c_pad != c_true:
            # Padded C columns must not take part in the softmax normalization.
            col = lax.broadcasted_iota(jnp.int32, (d_pad, c_pad), 1)
            energy = jnp.where(col < c_true, energy, jnp.inf)
        # PyTorch: softmax(max(e,-1,keepdim) - e) == softmax(-e).
        # Stable form: exp(min(e) - e) / sum(...)   (min(e) - e <= 0).
        z = jnp.min(energy, axis=-1, keepdims=True) - energy
        p = jnp.exp(z)
        attention = p * pl.reciprocal(jnp.sum(p, axis=-1, keepdims=True),
                                      approx=True)                    # (D_p, C_p)
        # Fold conv2 into the attention matmul: W_eff = w2 @ attention^T.
        weff = lax.dot_general(
            w2_ref[...], attention, (((1,), (1,)), ((), ())),
            preferred_element_type=jnp.float32)                       # (C_p, D_p)
        weff_ref[...] = weff.astype(weff_ref.dtype)


# --------------------------------------------------------------------------- #
# Phase 2: y_tile = W_eff @ coarse_tile + b2
# --------------------------------------------------------------------------- #
def _dfe_phase2_kernel(weff_ref, coarse_ref, b2_ref, out_ref):
    # weff_ref: (C_p, D_p) bf16   coarse_ref: (D_p, T) bf16   b2_ref: (C_p, 1) f32
    y = jnp.dot(weff_ref[...], coarse_ref[...],
                preferred_element_type=jnp.float32) + b2_ref[...]     # (C_p, T)
    out_ref[...] = y.astype(out_ref.dtype)


# --------------------------------------------------------------------------- #
# Wrapper
# --------------------------------------------------------------------------- #
def dfe_forward(feat_ffm, coarse_x, params, *, bn_eps=1e-5, max_tile_hw=1024):
    """feat_ffm: (N, Cin, H, W), coarse_x: (N, D, H, W)  (NCHW, like PyTorch)."""
    N, Cin, H, W = feat_ffm.shape
    _, D, _, _ = coarse_x.shape
    HW = H * W
    out_dtype = feat_ffm.dtype

    w1 = params["conv1_w"]          # (C, Cin, 1, 1)
    gamma = params["bn_gamma"]      # (C,)
    beta = params["bn_beta"]        # (C,)
    mean = params["bn_mean"]        # (C,)
    var = params["bn_var"]          # (C,)
    w2 = params["conv2_w"]          # (C, C, 1, 1)
    b2 = params["conv2_b"]          # (C,)
    C = w1.shape[0]

    # Fold BatchNorm (eval mode, running stats) into conv1's weight / bias.
    scale = gamma / jnp.sqrt(var + bn_eps)                            # (C,)
    w1_eff = w1[:, :, 0, 0] * scale[:, None]                          # (C, Cin)
    b1_eff = beta - scale * mean                                      # (C,)
    w2_m = w2[:, :, 0, 0]                                             # (C, C)

    # Padded / tiled layout: channels to multiples of 16 (bf16 sublanes),
    # HW to a multiple of the lane tile (multiple of 128).
    c_pad = _round_up(C, 16)
    cin_pad = _round_up(Cin, 16)
    d_pad = _round_up(D, 16)
    tile_hw = min(max_tile_hw, _round_up(HW, 128))
    hw_pad = _round_up(HW, tile_hw)
    n_t = hw_pad // tile_hw

    feat_flat = feat_ffm.reshape(N, Cin, HW)
    coarse_flat = coarse_x.reshape(N, D, HW)
    feat_p = jnp.pad(feat_flat,
                     ((0, 0), (0, cin_pad - Cin), (0, hw_pad - HW))
                     ).astype(jnp.bfloat16)
    coarse_p = jnp.pad(coarse_flat,
                       ((0, 0), (0, d_pad - D), (0, hw_pad - HW))
                       ).astype(jnp.bfloat16)

    w1_p = jnp.pad(w1_eff, ((0, c_pad - C), (0, cin_pad - Cin))).astype(jnp.bfloat16)
    b1_p = jnp.pad(b1_eff, ((0, c_pad - C),))[:, None].astype(jnp.float32)
    w2_p = jnp.pad(w2_m, ((0, c_pad - C), (0, c_pad - C))).astype(jnp.float32)
    b2_p = jnp.pad(b2, ((0, c_pad - C),))[:, None].astype(jnp.float32)

    cparams = pltpu.CompilerParams(
        dimension_semantics=("parallel", "arbitrary"),
        vmem_limit_bytes=48 * 1024 * 1024)

    # ---- Phase 1: per-batch effective weight W_eff = conv2_w @ attention^T ----
    weff = pl.pallas_call(
        functools.partial(_dfe_phase1_kernel, C),
        out_shape=jax.ShapeDtypeStruct((N, c_pad, d_pad), jnp.bfloat16),
        grid=(N, n_t),
        in_specs=[
            pl.BlockSpec((None, cin_pad, tile_hw), lambda n, t: (n, 0, t)),
            pl.BlockSpec((None, d_pad, tile_hw), lambda n, t: (n, 0, t)),
            pl.BlockSpec((c_pad, cin_pad), lambda n, t: (0, 0)),
            pl.BlockSpec((c_pad, 1), lambda n, t: (0, 0)),
            pl.BlockSpec((c_pad, c_pad), lambda n, t: (0, 0)),
        ],
        out_specs=pl.BlockSpec((None, c_pad, d_pad), lambda n, t: (n, 0, 0)),
        scratch_shapes=[pltpu.VMEM((d_pad, c_pad), jnp.float32)],
        compiler_params=cparams,
    )(feat_p, coarse_p, w1_p, b1_p, w2_p)

    # ---- Phase 2: y = W_eff @ coarse + b2, HW-tiled, fully parallel ----
    out = pl.pallas_call(
        _dfe_phase2_kernel,
        out_shape=jax.ShapeDtypeStruct((N, c_pad, hw_pad), out_dtype),
        grid=(N, n_t),
        in_specs=[
            pl.BlockSpec((None, c_pad, d_pad), lambda n, t: (n, 0, 0)),
            pl.BlockSpec((None, d_pad, tile_hw), lambda n, t: (n, 0, t)),
            pl.BlockSpec((c_pad, 1), lambda n, t: (0, 0)),
        ],
        out_specs=pl.BlockSpec((None, c_pad, tile_hw), lambda n, t: (n, 0, t)),
        compiler_params=pltpu.CompilerParams(
            dimension_semantics=("parallel", "parallel"),
            vmem_limit_bytes=48 * 1024 * 1024),
    )(weff, coarse_p, b2_p)

    return out[:, :C, :HW].reshape(N, C, H, W)


def init_params(key, in_channels, out_channels):
    k = jax.random.split(key, 6)
    C, Cin = out_channels, in_channels
    return {
        "conv1_w": 0.1 * jax.random.normal(k[0], (C, Cin, 1, 1), jnp.float32),
        "bn_gamma": 1.0 + 0.05 * jax.random.normal(k[1], (C,), jnp.float32),
        "bn_beta": 0.05 * jax.random.normal(k[2], (C,), jnp.float32),
        "bn_mean": jnp.zeros((C,), jnp.float32),   # PyTorch BN running-stat defaults
        "bn_var": jnp.ones((C,), jnp.float32),
        "conv2_w": 0.1 * jax.random.normal(k[3], (C, C, 1, 1), jnp.float32),
        "conv2_b": 0.05 * jax.random.normal(k[4], (C,), jnp.float32),
    }


if __name__ == "__main__":
    key = jax.random.PRNGKey(0)
    k_feat, k_coarse, k_params = jax.random.split(key, 3)

    N, Cin, C, D, H, W = 2, 8, 8, 8, 16, 16   # small, deterministic test shapes
    feat_ffm = jax.random.normal(k_feat, (N, Cin, H, W), jnp.float32)
    coarse_x = jax.random.normal(k_coarse, (N, D, H, W), jnp.float32)
    params = init_params(k_params, Cin, C)

    out = dfe_forward(feat_ffm, coarse_x, params)
    jax.block_until_ready(out)
    assert out.shape == (N, C, H, W)
    assert bool(jnp.all(jnp.isfinite(out)))
    print("KERNEL_OK")
</pallas_src>

<mosaic_0001>
module attributes {stable_mosaic.version = 11 : i64} {
  func.func @_dfe_phase1_kernel(%arg0: i32, %arg1: i32, %arg2: memref<1x16x256xbf16, #tpu.memory_space<vmem>>, %arg3: memref<1x16x256xbf16, #tpu.memory_space<vmem>>, %arg4: memref<16x16xbf16, #tpu.memory_space<vmem>>, %arg5: memref<16x1xf32, #tpu.memory_space<vmem>>, %arg6: memref<16x16xf32, #tpu.memory_space<vmem>>, %arg7: memref<1x16x16xbf16, #tpu.memory_space<vmem>>, %arg8: memref<16x16xf32, #tpu.memory_space<vmem>>) attributes {dimension_semantics = [#tpu.dimension_semantics<parallel>, #tpu.dimension_semantics<arbitrary>], iteration_bounds = array<i64: 2, 1>, scalar_prefetch = 0 : i64, scratch_operands = 1 : i64, tpu.core_type = #tpu.core_type<tc>, window_params = [{transform_indices = @transform_0, window_bounds = array<i64: 1, 16, 256>}, {transform_indices = @transform_1, window_bounds = array<i64: 1, 16, 256>}, {pipeline_mode = #tpu.pipeline_mode<synchronous>, transform_indices = @transform_2, window_bounds = array<i64: 16, 16>}, {pipeline_mode = #tpu.pipeline_mode<synchronous>, transform_indices = @transform_3, window_bounds = array<i64: 16, 1>}, {pipeline_mode = #tpu.pipeline_mode<synchronous>, transform_indices = @transform_4, window_bounds = array<i64: 16, 16>}, {transform_indices = @transform_5, window_bounds = array<i64: 1, 16, 16>}]} {
    %c0_i32 = arith.constant 0 : i32
    %0 = arith.cmpi eq, %arg1, %c0_i32 : i32
    %1 = arith.extui %0 : i1 to i32
    %c0_i32_0 = arith.constant 0 : i32
    %2 = arith.cmpi ne, %1, %c0_i32_0 : i32
    scf.if %2 {
      %cst_18 = arith.constant 0.000000e+00 : f32
      %22 = vector.broadcast %cst_18 : f32 to vector<16x16xf32>
      %c0_19 = arith.constant 0 : index
      %c0_20 = arith.constant 0 : index
      %23 = vector.load %arg8[%c0_19, %c0_20] : memref<16x16xf32, #tpu.memory_space<vmem>>, vector<16x16xf32>
      tpu.vector_store %arg8[%c0_19, %c0_20], %22 {strides = array<i32>} : memref<16x16xf32, #tpu.memory_space<vmem>>, vector<16x16xf32>,
    } else {
    }
    %c0 = arith.constant 0 : index
    %c0_1 = arith.constant 0 : index
    %3 = vector.load %arg4[%c0, %c0_1] : memref<16x16xbf16, #tpu.memory_space<vmem>>, vector<16x16xbf16>
    %c0_2 = arith.constant 0 : index
    %c0_3 = arith.constant 0 : index
    %c0_4 = arith.constant 0 : index
    %4 = vector.load %arg2[%c0_2, %c0_3, %c0_4] : memref<1x16x256xbf16, #tpu.memory_space<vmem>>, vector<1x16x256xbf16>
    %5 = vector.shape_cast %4 : vector<1x16x256xbf16> to vector<16x256xbf16>
    %cst = arith.constant dense<0.000000e+00> : vector<16x256xf32>
    %6 = tpu.matmul %3, %5, %cst {dimension_numbers = #tpu.dot_dimension_numbers<[1], [0], [0], [1], [0, 0, 1, 1], [], []>} : vector<16x16xbf16>, vector<16x256xbf16>, vector<16x256xf32> -> vector<16x256xf32>
    %c0_5 = arith.constant 0 : index
    %c0_6 = arith.constant 0 : index
    %7 = vector.load %arg5[%c0_5, %c0_6] : memref<16x1xf32, #tpu.memory_space<vmem>>, vector<16x1xf32>
    %8 = vector.broadcast %7 : vector<16x1xf32> to vector<16x256xf32>
    %9 = arith.addf %6, %8 : vector<16x256xf32>
    %cst_7 = arith.constant 0.000000e+00 : f32
    %10 = vector.broadcast %cst_7 : f32 to vector<16x256xf32>
    %11 = arith.maximumf %9, %10 : vector<16x256xf32>
    %12 = arith.truncf %11 : vector<16x256xf32> to vector<16x256xbf16>
    %c0_8 = arith.constant 0 : index
    %c0_9 = arith.constant 0 : index
    %13 = vector.load %arg8[%c0_8, %c0_9] : memref<16x16xf32, #tpu.memory_space<vmem>>, vector<16x16xf32>
    %c0_10 = arith.constant 0 : index
    %c0_11 = arith.constant 0 : index
    %c0_12 = arith.constant 0 : index
    %14 = vector.load %arg3[%c0_10, %c0_11, %c0_12] : memref<1x16x256xbf16, #tpu.memory_space<vmem>>, vector<1x16x256xbf16>
    %15 = vector.shape_cast %14 : vector<1x16x256xbf16> to vector<16x256xbf16>
    %cst_13 = arith.constant dense<0.000000e+00> : vector<16x16xf32>
    %16 = tpu.matmul %15, %12, %cst_13 {dimension_numbers = #tpu.dot_dimension_numbers<[1], [1], [0], [0], [0, 0, 1, 0], [], []>} : vector<16x256xbf16>, vector<16x256xbf16>, vector<16x16xf32> -> vector<16x16xf32>
    %17 = arith.addf %13, %16 : vector<16x16xf32>
    %c0_14 = arith.constant 0 : index
    %c0_15 = arith.constant 0 : index
    %18 = vector.load %arg8[%c0_14, %c0_15] : memref<16x16xf32, #tpu.memory_space<vmem>>, vector<16x16xf32>
    tpu.vector_store %arg8[%c0_14, %c0_15], %17 {strides = array<i32>} : memref<16x16xf32, #tpu.memory_space<vmem>>, vector<16x16xf32>,
    %c0_i32_16 = arith.constant 0 : i32
    %19 = arith.cmpi eq, %arg1, %c0_i32_16 : i32
    %20 = arith.extui %19 : i1 to i32
    %c0_i32_17 = arith.constant 0 : i32
    %21 = arith.cmpi ne, %20, %c0_i32_17 : i32
    scf.if %21 {
      %c0_18 = arith.constant 0 : index
      %c0_19 = arith.constant 0 : index
      %22 = vector.load %arg8[%c0_18, %c0_19] : memref<16x16xf32, #tpu.memory_space<vmem>>, vector<16x16xf32>
      %23 = tpu.iota {dimensions = array<i32: 1>} : vector<16x16xi32>
      %c8_i32 = arith.constant 8 : i32
      %24 = vector.broadcast %c8_i32 : i32 to vector<16x16xi32>
      %25 = arith.cmpi slt, %23, %24 : vector<16x16xi32>
      %cst_20 = arith.constant 0x7F800000 : f32
      %26 = vector.broadcast %cst_20 : f32 to vector<16x16xf32>
      %27 = arith.select %25, %22, %26 : vector<16x16xi1>, vector<16x16xf32>
      %cst_21 = arith.constant dense<0x7F800000> : vector<16xf32>
      %28 = vector.multi_reduction <minimumf>, %27, %cst_21 [1] : vector<16x16xf32> to vector<16xf32>
      %29 = vector.shape_cast %28 : vector<16xf32> to vector<16x1xf32>
      %30 = vector.broadcast %29 : vector<16x1xf32> to vector<16x16xf32>
      %31 = arith.subf %30, %27 : vector<16x16xf32>
      %32 = math.exp %31 : vector<16x16xf32>
      %cst_22 = arith.constant dense<0.000000e+00> : vector<16xf32>
      %33 = vector.multi_reduction <add>, %32, %cst_22 [1] : vector<16x16xf32> to vector<16xf32>
      %34 = vector.shape_cast %33 : vector<16xf32> to vector<16x1xf32>
      %35 = tpu.reciprocal %34 {approx = true} : vector<16x1xf32> -> vector<16x1xf32>
      %36 = vector.broadcast %35 : vector<16x1xf32> to vector<16x16xf32>
      %37 = arith.mulf %32, %36 : vector<16x16xf32>
      %c0_23 = arith.constant 0 : index
      %c0_24 = arith.constant 0 : index
      %38 = vector.load %arg6[%c0_23, %c0_24] : memref<16x16xf32, #tpu.memory_space<vmem>>, vector<16x16xf32>
      %cst_25 = arith.constant dense<0.000000e+00> : vector<16x16xf32>
      %39 = tpu.matmul %38, %37, %cst_25 {dimension_numbers = #tpu.dot_dimension_numbers<[1], [1], [0], [0], [0, 0, 1, 0], [], []>} : vector<16x16xf32>, vector<16x16xf32>, vector<16x16xf32> -> vector<16x16xf32>
      %40 = arith.truncf %39 : vector<16x16xf32> to vector<16x16xbf16>
      %c0_26 = arith.constant 0 : index
      %c0_27 = arith.constant 0 : index
      %c0_28 = arith.constant 0 : index
      %41 = vector.load %arg7[%c0_26, %c0_27, %c0_28] : memref<1x16x16xbf16, #tpu.memory_space<vmem>>, vector<1x16x16xbf16>
      %42 = vector.shape_cast %41 : vector<1x16x16xbf16> to vector<16x16xbf16>
      %43 = vector.shape_cast %40 : vector<16x16xbf16> to vector<1x16x16xbf16>
      tpu.vector_store %arg7[%c0_26, %c0_27, %c0_28], %43 {strides = array<i32>} : memref<1x16x16xbf16, #tpu.memory_space<vmem>>, vector<1x16x16xbf16>,
    } else {
    }
    return
  }
  func.func @transform_0(%arg0: i32, %arg1: i32) -> (i32, i32, i32) {
    %c0_i32 = arith.constant 0 : i32
    %c0_i32_0 = arith.constant 0 : i32
    return %arg0, %c0_i32, %arg1 : i32, i32, i32
  }
  func.func @transform_1(%arg0: i32, %arg1: i32) -> (i32, i32, i32) {
    %c0_i32 = arith.constant 0 : i32
    %c0_i32_0 = arith.constant 0 : i32
    return %arg0, %c0_i32, %arg1 : i32, i32, i32
  }
  func.func @transform_2(%arg0: i32, %arg1: i32) -> (i32, i32) {
    %c0_i32 = arith.constant 0 : i32
    %c0_i32_0 = arith.constant 0 : i32
    %c0_i32_1 = arith.constant 0 : i32
    return %c0_i32, %c0_i32_0 : i32, i32
  }
  func.func @transform_3(%arg0: i32, %arg1: i32) -> (i32, i32) {
    %c0_i32 = arith.constant 0 : i32
    %c0_i32_0 = arith.constant 0 : i32
    %c0_i32_1 = arith.constant 0 : i32
    return %c0_i32, %c0_i32_0 : i32, i32
  }
  func.func @transform_4(%arg0: i32, %arg1: i32) -> (i32, i32) {
    %c0_i32 = arith.constant 0 : i32
    %c0_i32_0 = arith.constant 0 : i32
    %c0_i32_1 = arith.constant 0 : i32
    return %c0_i32, %c0_i32_0 : i32, i32
  }
  func.func @transform_5(%arg0: i32, %arg1: i32) -> (i32, i32, i32) {
    %c0_i32 = arith.constant 0 : i32
    %c0_i32_0 = arith.constant 0 : i32
    %c0_i32_1 = arith.constant 0 : i32
    return %arg0, %c0_i32, %c0_i32_0 : i32, i32, i32
  }
}

</mosaic_0001>

<llo_original>
// kernel: tpu_custom_call.1
$region0: #{tpu_custom_call.1}
  #allocation0 [shape = 'u32[]', space=smem, size = 0x4, offset = 0x4, fixed_abs, tag = 'smem constant byte address 0x4 - core index']
  #allocation1 [shape = 'u32[72,128]{1,0:T(1,128)}', space=vmem, size = 0x9000, scoped, tag = 'internal scratch']
  #allocation2 [shape = 'f32[16,16]{1,0:T(8,128)}', space=vmem, size = 0x2000, scoped, tag = 'scratch operand']
  %s0 = inlined_call_operand.hbm [shape: bf16[2,16,256], index: 0, kind: input, shape index: {}]
  %s1 = inlined_call_operand.hbm [shape: bf16[2,16,256], index: 1, kind: input, shape index: {}]
  %s2 = inlined_call_operand.hbm [shape: bf16[16,16], index: 2, kind: input, shape index: {}]
  %s3 = inlined_call_operand.vmem [shape: f32[16,1], index: 3, kind: input, shape index: {}]
  %s4 = inlined_call_operand.vmem [shape: f32[16,16], index: 4, kind: input, shape index: {}]
  %s5 = inlined_call_operand.hbm [shape: bf16[2,16,16], index: 5, kind: output, shape index: {}]
  %s6 = sld [smem:[#allocation0]]
  $region73: #{tpu_custom_call.1} parent=0
    _
  %s8 = ssub.s32 1, %s6
  %s9 = scalar_select 0, %s8, %s6
  $region1: #{tpu_custom_call.1} parent=0
    #allocation3 [shape = 'u8[16384]{0}', space=vmem, size = 0x4000, scoped, tag = 'input window, operand 0']
    #allocation4 [shape = 's32[2]{0}', space=sflag, size = 0x8, scoped, tag = 'scoped memory for tpu_custom_call.1']
    #allocation5 [shape = 's32[2]{0}', space=sflag, size = 0x8, scoped, tag = 'scoped memory for tpu_custom_call.1']
    #allocation6 [shape = 'u8[16384]{0}', space=vmem, size = 0x4000, scoped, tag = 'input window, operand 1']
    #allocation7 [shape = 's32[2]{0}', space=sflag, size = 0x8, scoped, tag = 'scoped memory for tpu_custom_call.1']
    #allocation8 [shape = 'u8[4096]{0}', space=vmem, size = 0x1000, scoped, tag = 'input window, operand 2, single buffered']
    #allocation9 [shape = 'u8[8192]{0}', space=vmem, size = 0x2000, scoped, tag = 'output window, operand 0']
    %10 = vsyncpa [#allocation4], 0
    %s11 = scalar_lea.sflag [#allocation4], 1
    %12 = vsyncpa %s11, 0
    %13 = vsyncpa [#allocation7], 0
    %s14 = scalar_lea.sflag [#allocation7], 1
    %15 = vsyncpa %s14, 0
    %16 = vsyncpa [#allocation5], 0
    %s17 = scalar_lea.sflag [#allocation5], 1
    %18 = vsyncpa %s17, 0
    loop: start=0, step=1, limit=4
    $region2: #{tpu_custom_call.1} parent=1 // loop_pre_header
      _
    $region3: #{tpu_custom_call.1} parent=1 // loop_header
      %s20 = sphi 0, %s24
      %p21 = scmp.ge.s32.totalorder %s20, 4
      %s27 = sphi 0, %s39
      %s28 = sphi 0, %s35
      %s29 = sphi 0, %s27
      %s30 = sphi 0, %s28
      %s31 = sphi 0, %s29
      %s32 = sphi 0, %s30
      %s44 = sphi 0, %s46
      %s47 = sphi 0, %s44
      %s48 = sphi 0, %s47
      %s64 = sphi 0, %s48
      %s72 = sphi 0, %s74
      %s75 = sphi 0, %s72
      %s76 = sphi 0, %s75
      %s92 = sphi 0, %s76
      %s96 = sphi 0, %s96
      %s98 = sphi 0, %s96
      %s99 = sphi 0, %s98
      %s113 = sphi 0, %s99
      %s117 = sphi 0, %s117
      %s119 = sphi 0, %s117
      %s120 = sphi 0, %s119
      %s134 = sphi 0, %s120
      %s138 = sphi 0, %s138
      %s140 = sphi 0, %s138
      %s141 = sphi 0, %s140
      %s155 = sphi 0, %s141
      %s161 = sphi 0, %s163
      %s164 = sphi 0, %s161
      %s165 = sphi 0, %s164
      %s181 = sphi 0, %s165
    $region4: #{tpu_custom_call.1} parent=1 // loop_header_branch
      %23 = sbr.rel (%p21) target = $region8
    $region5: #{tpu_custom_call.1} parent=1 // loop_body
      %s25 = ssub.s32 %s20, 1
      %s26 = ssub.s32 %s20, 2
      %s33 = sadd.s32 1, %s28
      %p34 = scmp.ge.s32.totalorder %s33, 1
      %s35 = scalar_select %p34, 0, %s33
      %s36 = sadd.s32 1, %s27
      %s37 = scalar_select %p34, %s36, %s27
      %p38 = scmp.ge.s32.totalorder %s37, 2
      %s39 = scalar_select %p38, 0, %s37
      %s40 = ssub.s32 %s27, %s39
      %s41 = ssub.s32 %s28, %s35
      %s42 = sor.u32 %s40, %s41
      %p43 = scmp.eq.s32.totalorder %s42, 0
      %s45 = sadd.s32 %s44, 1
      %s46 = scalar_select %p43, %s44, %s45
      %p49 = pneg %p43
      %p50 = scmp.eq.s32.totalorder %s20, 1
      %p51 = por %p49, %p50
      %p52 = scmp.ne.s32.totalorder %s44, %s47
      %p53 = scmp.eq.s32.totalorder %s20, 0
      %p54 = por %p52, %p53
      %p55 = scmp.ne.s32.totalorder %s44, %s47
      %p56 = scmp.eq.s32.totalorder %s25, 1
      %p57 = por %p55, %p56
      %p58 = scmp.ne.s32.totalorder %s47, %s48
      %p59 = scmp.eq.s32.totalorder %s25, 0
      %p60 = por %p58, %p59
      %p61 = scmp.ne.s32.totalorder %s47, %s48
      %p62 = scmp.eq.s32.totalorder %s26, 1
      %p63 = por %p61, %p62
      %p65 = scmp.ne.s32.totalorder %s48, %s64
      %p66 = scmp.eq.s32.totalorder %s26, 0
      %p67 = por %p65, %p66
      %s68 = ssub.s32 %s27, %s39
      %s69 = ssub.s32 %s28, %s35
      %s70 = sor.u32 %s68, %s69
      %p71 = scmp.eq.s32.totalorder %s70, 0
      %s73 = sadd.s32 %s72, 1
      %s74 = scalar_select %p71, %s72, %s73
      %p77 = pneg %p71
      %p78 = scmp.eq.s32.totalorder %s20, 1
      %p79 = por %p77, %p78
      %p80 = scmp.ne.s32.totalorder %s72, %s75
      %p81 = scmp.eq.s32.totalorder %s20, 0
      %p82 = por %p80, %p81
      %p83 = scmp.ne.s32.totalorder %s72, %s75
      %p84 = scmp.eq.s32.totalorder %s25, 1
      %p85 = por %p83, %p84
      %p86 = scmp.ne.s32.totalorder %s75, %s76
      %p87 = scmp.eq.s32.totalorder %s25, 0
      %p88 = por %p86, %p87
      %p89 = scmp.ne.s32.totalorder %s75, %s76
      %p90 = scmp.eq.s32.totalorder %s26, 1
      %p91 = por %p89, %p90
      %p93 = scmp.ne.s32.totalorder %s76, %s92
      %p94 = scmp.eq.s32.totalorder %s26, 0
      %p95 = por %p93, %p94
      %s97 = sadd.s32 %s96, 1
      %p100 = scmp.eq.s32.totalorder %s20, 1
      %p101 = scmp.ne.s32.totalorder %s96, %s98
      %p102 = scmp.eq.s32.totalorder %s20, 0
      %p103 = por %p101, %p102
      %p104 = scmp.ne.s32.totalorder %s96, %s98
      %p105 = scmp.eq.s32.totalorder %s25, 1
      %p106 = por %p104, %p105
      %p107 = scmp.ne.s32.totalorder %s98, %s99
      %p108 = scmp.eq.s32.totalorder %s25, 0
      %p109 = por %p107, %p108
      %p110 = scmp.ne.s32.totalorder %s98, %s99
      %p111 = scmp.eq.s32.totalorder %s26, 1
      %p112 = por %p110, %p111
      %p114 = scmp.ne.s32.totalorder %s99, %s113
      %p115 = scmp.eq.s32.totalorder %s26, 0
      %p116 = por %p114, %p115
      %s118 = sadd.s32 %s117, 1
      %p121 = scmp.eq.s32.totalorder %s20, 1
      %p122 = scmp.ne.s32.totalorder %s117, %s119
      %p123 = scmp.eq.s32.totalorder %s20, 0
      %p124 = por %p122, %p123
      %p125 = scmp.ne.s32.totalorder %s117, %s119
      %p126 = scmp.eq.s32.totalorder %s25, 1
      %p127 = por %p125, %p126
      %p128 = scmp.ne.s32.totalorder %s119, %s120
      %p129 = scmp.eq.s32.totalorder %s25, 0
      %p130 = por %p128, %p129
      %p131 = scmp.ne.s32.totalorder %s119, %s120
      %p132 = scmp.eq.s32.totalorder %s26, 1
      %p133 = por %p131, %p132
      %p135 = scmp.ne.s32.totalorder %s120, %s134
      %p136 = scmp.eq.s32.totalorder %s26, 0
      %p137 = por %p135, %p136
      %s139 = sadd.s32 %s138, 1
      %p142 = scmp.eq.s32.totalorder %s20, 1
      %p143 = scmp.ne.s32.totalorder %s138, %s140
      %p144 = scmp.eq.s32.totalorder %s20, 0
      %p145 = por %p143, %p144
      %p146 = scmp.ne.s32.totalorder %s138, %s140
      %p147 = scmp.eq.s32.totalorder %s25, 1
      %p148 = por %p146, %p147
      %p149 = scmp.ne.s32.totalorder %s140, %s141
      %p150 = scmp.eq.s32.totalorder %s25, 0
      %p151 = por %p149, %p150
      %p152 = scmp.ne.s32.totalorder %s140, %s141
      %p153 = scmp.eq.s32.totalorder %s26, 1
      %p154 = por %p152, %p153
      %p156 = scmp.ne.s32.totalorder %s141, %s155
      %p157 = scmp.eq.s32.totalorder %s26, 0
      %p158 = por %p156, %p157
      %s159 = ssub.s32 %s27, %s39
      %p160 = scmp.eq.s32.totalorder %s159, 0
      %s162 = sadd.s32 %s161, 1
      %s163 = scalar_select %p160, %s161, %s162
      %p166 = pneg %p160
      %p167 = scmp.eq.s32.totalorder %s20, 1
      %p168 = por %p166, %p167
      %p169 = scmp.ne.s32.totalorder %s161, %s164
      %p170 = scmp.eq.s32.totalorder %s20, 0
      %p171 = por %p169, %p170
      %p172 = scmp.ne.s32.totalorder %s161, %s164
      %p173 = scmp.eq.s32.totalorder %s25, 1
      %p174 = por %p172, %p173
      %p175 = scmp.ne.s32.totalorder %s164, %s165
      %p176 = scmp.eq.s32.totalorder %s25, 0
      %p177 = por %p175, %p176
      %p178 = scmp.ne.s32.totalorder %s164, %s165
      %p179 = scmp.eq.s32.totalorder %s26, 1
      %p180 = por %p178, %p179
      %p182 = scmp.ne.s32.totalorder %s165, %s181
      %p183 = scmp.eq.s32.totalorder %s26, 0
      %p184 = por %p182, %p183
      %p185 = scmp.le.s32.totalorder 1, %s20
      %p186 = scmp.lt.s32.totalorder %s20, 3
      %p187 = pnand %p185, %p186
      %p188 = pneg %p187
      // Predicated region
      $region9: #{tpu_custom_call.1} parent=5 // pred_check
        _
      $region10: #{tpu_custom_call.1} parent=5 // pred_check_branch
        %190 = sbr.rel (%p187) target = $region12
      $region11: #{tpu_custom_call.1} parent=5 // pred_region
        %s191 = ssub.s32 %s20, 1
        // Predicated region
        $region13: #{tpu_custom_call.1} parent=11 // pred_check
          %p192 = pneg %p109
        $region14: #{tpu_custom_call.1} parent=11 // pred_check_branch
          %194 = sbr.rel (%p192) target = $region16
        $region15: #{tpu_custom_call.1} parent=11 // pred_region
          %196 = vsyncadd [#allocation7], 0
          %s197 = sshll.u32 %s2, 4
          %s198 = int_to_ptr.hbm [resolvable:$true] %s197
          %s199 = sshll.u32 [#allocation8], 4
          %s200 = int_to_ptr.vmem [resolvable:$true] %s199
          %205 = dma.hbm_to_vmem [thread:$0]  %s198, 128, %s200, [#allocation7], 64, 64, 4
        $region16: #{tpu_custom_call.1} parent=11 // pred_fallthru
          _
        // Predicated region
        $region17: #{tpu_custom_call.1} parent=11 // pred_check
          %p206 = pneg %p130
        $region18: #{tpu_custom_call.1} parent=11 // pred_check_branch
          %208 = sbr.rel (%p206) target = $region20
        $region19: #{tpu_custom_call.1} parent=11 // pred_region
          _
        $region20: #{tpu_custom_call.1} parent=11 // pred_fallthru
          _
        // Predicated region
        $region21: #{tpu_custom_call.1} parent=11 // pred_check
          %p209 = pneg %p151
        $region22: #{tpu_custom_call.1} parent=11 // pred_check_branch
          %211 = sbr.rel (%p209) target = $region24
        $region23: #{tpu_custom_call.1} parent=11 // pred_region
          _
        $region24: #{tpu_custom_call.1} parent=11 // pred_fallthru
          _
      $region12: #{tpu_custom_call.1} parent=5 // pred_fallthru
        _
      %p212 = scmp.lt.s32.totalorder %s20, 2
      // Predicated region
      $region25: #{tpu_custom_call.1} parent=5 // pred_check
        %p213 = pneg %p212
      $region26: #{tpu_custom_call.1} parent=5 // pred_check_branch
        %215 = sbr.rel (%p213) target = $region28
      $region27: #{tpu_custom_call.1} parent=5 // pred_region
        // Predicated region
        $region29: #{tpu_custom_call.1} parent=27 // pred_check
          %p216 = pneg %p54
        $region30: #{tpu_custom_call.1} parent=27 // pred_check_branch
          %218 = sbr.rel (%p216) target = $region32
        $region31: #{tpu_custom_call.1} parent=27 // pred_region
          %s219 = sand.u32 %s44, 1
          %s220 = scalar_lea.sflag [#allocation4], %s219
          %s221 = sand.u32 %s44, 1
          %s222 = smul.addr %s221, 16
          %s223 = scalar_lea.vmem [#allocation3], %s222
          %s224 = smul.u32 2, %s28
          %226 = vsyncadd %s220, 0
          %s227 = smul.addr %s27, 4
          %s228 = sadd.s32 %s224, %s227
          %s229 = smul.addr %s228, 4
          %s230 = scalar_lea.hbm %s0, %s229
          %s231 = sshll.u32 %s230, 4
          %s232 = int_to_ptr.hbm [resolvable:$true] %s231
          %s233 = sshll.u32 %s223, 4
          %s234 = int_to_ptr.vmem [resolvable:$true] %s233
          %239 = dma.hbm_to_vmem [thread:$0]  %s232, 256, %s234, %s220, 128, 128, 8
        $region32: #{tpu_custom_call.1} parent=27 // pred_fallthru
          _
        // Predicated region
        $region33: #{tpu_custom_call.1} parent=27 // pred_check
          %p240 = pneg %p82
        $region34: #{tpu_custom_call.1} parent=27 // pred_check_branch
          %242 = sbr.rel (%p240) target = $region36
        $region35: #{tpu_custom_call.1} parent=27 // pred_region
          %s243 = sand.u32 %s20, 1
          %s244 = scalar_lea.sflag [#allocation7], %s243
          %s245 = sand.u32 %s72, 1
          %s246 = smul.addr %s245, 16
          %s247 = scalar_lea.vmem [#allocation6], %s246
          %s248 = smul.u32 2, %s28
          %250 = vsyncadd %s244, 0
          %s251 = smul.addr %s27, 4
          %s252 = sadd.s32 %s248, %s251
          %s253 = smul.addr %s252, 4
          %s254 = scalar_lea.hbm %s1, %s253
          %s255 = sshll.u32 %s254, 4
          %s256 = int_to_ptr.hbm [resolvable:$true] %s255
          %s257 = sshll.u32 %s247, 4
          %s258 = int_to_ptr.vmem [resolvable:$true] %s257
          %263 = dma.hbm_to_vmem [thread:$0]  %s256, 256, %s258, %s244, 128, 128, 8
        $region36: #{tpu_custom_call.1} parent=27 // pred_fallthru
          _
      $region28: #{tpu_custom_call.1} parent=5 // pred_fallthru
        _
      %p264 = scmp.le.s32.totalorder 1, %s20
      %p265 = scmp.lt.s32.totalorder %s20, 3
      %p266 = pnand %p264, %p265
      %p267 = pneg %p266
      // Predicated region
      $region37: #{tpu_custom_call.1} parent=5 // pred_check
        _
      $region38: #{tpu_custom_call.1} parent=5 // pred_check_branch
        %269 = sbr.rel (%p266) target = $region40
      $region39: #{tpu_custom_call.1} parent=5 // pred_region
        %s270 = ssub.s32 %s20, 1
        %s271 = sand.u32 %s47, 1
        %s272 = scalar_lea.sflag [#allocation4], %s271
        %s273 = sand.u32 %s47, 1
        %s274 = smul.addr %s273, 16
        %s275 = scalar_lea.vmem [#allocation3], %s274
        // Predicated region
        $region41: #{tpu_custom_call.1} parent=39 // pred_check
          %p276 = pneg %p60
        $region42: #{tpu_custom_call.1} parent=39 // pred_check_branch
          %278 = sbr.rel (%p276) target = $region44
        $region43: #{tpu_custom_call.1} parent=39 // pred_region
          %280 = dma.done %s272, 256
        $region44: #{tpu_custom_call.1} parent=39 // pred_fallthru
          _
        %s281 = sand.u32 %s25, 1
        %s282 = scalar_lea.sflag [#allocation7], %s281
        %s283 = sand.u32 %s75, 1
        %s284 = smul.addr %s283, 16
        %s285 = scalar_lea.vmem [#allocation6], %s284
        // Predicated region
        $region45: #{tpu_custom_call.1} parent=39 // pred_check
          %p286 = pneg %p88
        $region46: #{tpu_custom_call.1} parent=39 // pred_check_branch
          %288 = sbr.rel (%p286) target = $region48
        $region47: #{tpu_custom_call.1} parent=39 // pred_region
          %290 = dma.done %s282, 256
        $region48: #{tpu_custom_call.1} parent=39 // pred_fallthru
          _
        // Predicated region
        $region49: #{tpu_custom_call.1} parent=39 // pred_check
          %p291 = pneg %p109
        $region50: #{tpu_custom_call.1} parent=39 // pred_check_branch
          %293 = sbr.rel (%p291) target = $region52
        $region51: #{tpu_custom_call.1} parent=39 // pred_region
          %295 = dma.done [#allocation7], 128
        $region52: #{tpu_custom_call.1} parent=39 // pred_fallthru
          _
        %s296 = sand.u32 %s47, 1
        %s297 = scalar_lea.sflag [#allocation4], %s296
        %s298 = sand.u32 %s47, 1
        %s299 = smul.addr %s298, 16
        %s300 = scalar_lea.vmem [#allocation3], %s299
        %p301 = pneg %p60
        %p302 = pneg %p57
        %s303 = sand.u32 %s25, 1
        %s304 = scalar_lea.sflag [#allocation7], %s303
        %s305 = sand.u32 %s75, 1
        %s306 = smul.addr %s305, 16
        %s307 = scalar_lea.vmem [#allocation6], %s306
        %p308 = pneg %p88
        %p309 = pneg %p85
        %p310 = pneg %p109
        %p311 = pneg %p106
        %p312 = pneg %p130
        %p313 = pneg %p127
        %p314 = pneg %p151
        %p315 = pneg %p148
        %p316 = pneg %p177
        %p317 = pneg %p174
        %s318 = sand.u32 %s164, 1
        %s319 = scalar_lea.sflag [#allocation5], %s318
        %s320 = sand.u32 %s164, 1
        %s321 = smul.addr %s320, 8
        %s322 = scalar_lea.vmem [#allocation9], %s321
        %s323 = smul.u32 2, %s30
        %s324 = smul.u32 2, %s30
        %p326 = scmp.eq.s32.totalorder %s30, 0
        // Predicated region
        $region53: #{tpu_custom_call.1} parent=39 // pred_check
          %p327 = pneg %p326
        $region54: #{tpu_custom_call.1} parent=39 // pred_check_branch
          %329 = sbr.rel (%p327) target = $region56
        $region55: #{tpu_custom_call.1} parent=39 // pred_region
          %vm330 = vcmask 130048
          %331 = vst.msk [vmem:[#allocation2] sm:$0xff] %vm330, 0.0
          %332 = vst.msk [vmem:[#allocation2 + $0x8] sm:$0xff] %vm330, 0.0
        $region56: #{tpu_custom_call.1} parent=39 // pred_fallthru
          _
        %v333 = vld [vmem:[#allocation8] sm:$0xf]
        %v334 = vld [vmem:[#allocation8 + $0x4] sm:$0xf]
        %v335 = vld [vmem:[%s275] sm:$0xff]
        %v336 = vld [vmem:[%s275 + $0x8] sm:$0xff]
        %v337 = vld [vmem:[%s3] sm:$0xff]
        %v338 = vld [vmem:[%s3 + $0x8] sm:$0xff]
        %340 = vset.pattern.permute.xlu0 0
        %341 = vperm.xlu0 %340, %v337
        %v342 = vpop.permute.xlu0 %341
        %345 = vset.pattern.permute.xlu0 0
        %346 = vperm.xlu0 %345, %v338
        %v347 = vpop.permute.xlu0 %346
        %v351 = vunpack.c.l.b16 %v333
        %v352 = vunpack.c.l.b16 %v334
        %v353 = vpack.c.b16 %v352, %v351
        %v356 = vunpack.c.l.b16 %v335
        %v357 = vunpack.c.h.b16 %v335
        %v358 = vunpack.c.l.b16 %v336
        %v359 = vunpack.c.h.b16 %v336
        %v360 = vpack.c.b16 %v358, %v356
        %v361 = vpack.c.b16 %v359, %v357
        %vm364 = vcmask 130048
        %v366 = vsel %vm364, %v353, 0
        %368 = vmatpush.bf16.msra.mxu0 0
        %369 = vmatpush.bf16.msra.mxu0 0
        %370 = vmatpush.bf16.msra.mxu0 0
        %371 = vmatpush.bf16.msra.mxu0 0
        %372 = vmatpush.bf16.msra.mxu0 0
        %373 = vmatpush.bf16.msra.mxu0 0
        %374 = vmatpush.bf16.msra.mxu0 0
        %375 = vmatpush.bf16.msra.mxu0 %v360
        %376 = vmatmul.bf16.gmra.mxu0 %v366
        %v377 = vpop.f32.mrf.mxu0
        %v378 = vadd.f32 %v342, %v377
        %v379 = vpop.f32.mrf.mxu0
        %v380 = vadd.f32 %v347, %v379
        %381 = vdwg.mxu0
        %382 = vmatpush.bf16.msra.mxu0 0
        %383 = vmatpush.bf16.msra.mxu0 0
        %384 = vmatpush.bf16.msra.mxu0 0
        %385 = vmatpush.bf16.msra.mxu0 0
        %386 = vmatpush.bf16.msra.mxu0 0
        %387 = vmatpush.bf16.msra.mxu0 0
        %388 = vmatpush.bf16.msra.mxu0 0
        %389 = vmatpush.bf16.msra.mxu0 %v361
        %390 = vmatmul.bf16.gmra.mxu0 %v366
        %v391 = vpop.f32.mrf.mxu0
        %v392 = vadd.f32 %v342, %v391
        %v393 = vpop.f32.mrf.mxu0
        %v394 = vadd.f32 %v347, %v393
        %395 = vdwg.mxu0
        %v396 = vmax.f32 %v378, 0.0
        %v397 = vmax.f32 %v392, 0.0
        %v398 = vmax.f32 %v380, 0.0
        %v399 = vmax.f32 %v394, 0.0
        %v400 = vpack.c.bf16 %v398, %v396
        %v401 = vpack.c.bf16 %v399, %v397
        %v402 = vld [vmem:[#allocation2] sm:$0xff]
        %v403 = vld [vmem:[#allocation2 + $0x8] sm:$0xff]
        %v404 = vld [vmem:[%s285] sm:$0xff]
        %v405 = vld [vmem:[%s285 + $0x8] sm:$0xff]
        %v408 = vunpack.c.l.b16 %v404
        %v409 = vunpack.c.h.b16 %v404
        %v410 = vunpack.c.l.b16 %v405
        %v411 = vunpack.c.h.b16 %v405
        %v412 = vpack.c.b16 %v410, %v408
        %v413 = vpack.c.b16 %v411, %v409
        %416 = vmatpush.bf16.xpose.msra.mxu0 0
        %417 = vmatpush.bf16.xpose.msra.mxu0 0
        %418 = vmatpush.bf16.xpose.msra.mxu0 0
        %419 = vmatpush.bf16.xpose.msra.mxu0 0
        %420 = vmatpush.bf16.xpose.msra.mxu0 0
        %421 = vmatpush.bf16.xpose.msra.mxu0 0
        %422 = vmatpush.bf16.xpose.msra.mxu0 0
        %423 = vmatpush.bf16.xpose.msra.mxu0 %v400
        %424 = vmatmul.bf16.gmra.mxu0 %v412
        %v425 = vpop.f32.mrf.mxu0
        %v426 = vadd.f32 0.0, %v425
        %v427 = vpop.f32.mrf.mxu0
        %v428 = vadd.f32 0.0, %v427
        %429 = vdwg.mxu0
        %430 = vmatpush.bf16.xpose.msra.mxu0 0
        %431 = vmatpush.bf16.xpose.msra.mxu0 0
        %432 = vmatpush.bf16.xpose.msra.mxu0 0
        %433 = vmatpush.bf16.xpose.msra.mxu0 0
        %434 = vmatpush.bf16.xpose.msra.mxu0 0
        %435 = vmatpush.bf16.xpose.msra.mxu0 0
        %436 = vmatpush.bf16.xpose.msra.mxu0 0
        %437 = vmatpush.bf16.xpose.msra.mxu0 %v401
        %438 = vmatmul.bf16.gmra.mxu0 %v413
        %v439 = vpop.f32.mrf.mxu0
        %v440 = vadd.f32 %v426, %v439
        %v441 = vpop.f32.mrf.mxu0
        %v442 = vadd.f32 %v428, %v441
        %443 = vdwg.mxu0
        %v444 = vadd.f32 %v402, %v440
        %v445 = vadd.f32 %v403, %v442
        %446 = vst.msk [vmem:[#allocation2] sm:$0xff] %vm364, %v444
        %447 = vst.msk [vmem:[#allocation2 + $0x8] sm:$0xff] %vm364, %v445
        // Predicated region
        $region57: #{tpu_custom_call.1} parent=39 // pred_check
          %p448 = pneg %p326
        $region58: #{tpu_custom_call.1} parent=39 // pred_check_branch
          %450 = sbr.rel (%p448) target = $region60
        $region59: #{tpu_custom_call.1} parent=39 // pred_region
          %v451 = vld [vmem:[#allocation2] sm:$0xff]
          %v452 = vld [vmem:[#allocation2 + $0x8] sm:$0xff]
          %v453 = vlaneseq
          %v454 = vand.u32 %v453, 127
          %vm455 = vcmp.lt.s32.totalorder %v454, 8
          %v456 = vsel %vm455, %v451, inf
          %v457 = vsel %vm455, %v452, inf
          %v458 = vsel %vm364, %v456, inf
          %459 = vmin.xlane.f32.xlu0 %v458
          %v460 = vpop.xlane.xlu0 %459
          %v461 = vsel %vm364, %v457, inf
          %462 = vmin.xlane.f32.xlu0 %v461
          %v463 = vpop.xlane.xlu0 %462
          %v464 = vsub.f32 %v460, %v456
          %v465 = vsub.f32 %v463, %v457
          %v466 = vmul.f32 %v464, 1.442695
          %v467 = vpow.pop %v466
          %v468 = vmul.f32 %v465, 1.442695
          %v469 = vpow.pop %v468
          %v470 = vsel %vm364, %v467, 0.0
          %471 = vadd.xlane.f32.xlu0 %v470
          %v472 = vpop.xlane.xlu0 %471
          %v473 = vsel %vm364, %v469, 0.0
          %474 = vadd.xlane.f32.xlu0 %v473
          %v475 = vpop.xlane.xlu0 %474
          %v476 = vrcp.pop %v472
          %v477 = vrcp.pop %v475
          %v478 = vmul.f32 %v467, %v476
          %v479 = vmul.f32 %v469, %v477
          %v480 = vld [vmem:[%s4] sm:$0xff]
          %v481 = vld [vmem:[%s4 + $0x8] sm:$0xff]
          %v483 = vsel %vm364, %v480, 0
          %v486 = vsel %vm364, %v481, 0
          %v489 = vsel %vm364, %v478, 0
          %v492 = vsel %vm364, %v479, 0
          %494 = vmatpush.xpose.msra.mxu0 0.0
          %495 = vmatpush.xpose.msra.mxu0 0.0
          %496 = vmatpush.xpose.msra.mxu0 0.0
          %497 = vmatpush.xpose.msra.mxu0 0.0
          %498 = vmatpush.xpose.msra.mxu0 0.0
          %499 = vmatpush.xpose.msra.mxu0 0.0
          %500 = vmatpush.xpose.msra.mxu0 0.0
          %501 = vmatpush.xpose.msra.mxu0 0.0
          %502 = vmatpush.xpose.msra.mxu0 0.0
          %503 = vmatpush.xpose.msra.mxu0 0.0
          %504 = vmatpush.xpose.msra.mxu0 0.0
          %505 = vmatpush.xpose.msra.mxu0 0.0
          %506 = vmatpush.xpose.msra.mxu0 0.0
          %507 = vmatpush.xpose.msra.mxu0 0.0
          %508 = vmatpush.xpose.msra.mxu0 %v492
          %509 = vmatpush.xpose.msra.mxu0 %v489
          %510 = vmatmul.f32.gmra.mxu0 %v483
          %v511 = vpop.f32.mrf.mxu0
          %v512 = vadd.f32 0.0, %v511
          %513 = vmatmul.f32.gmra.mxu0 %v486
          %v514 = vpop.f32.mrf.mxu0
          %v515 = vadd.f32 0.0, %v514
          %516 = vdwg.mxu0
          %v517 = vpack.c.bf16 %v512, %v512
          %v518 = vpack.c.bf16 %v515, %v515
          %vm519 = vcmask 125952
          %520 = vst.msk [vmem:[%s322] sm:$0xf] %vm519, %v517
          %521 = vst.msk [vmem:[%s322 + $0x4] sm:$0xf] %vm519, %v518
        $region60: #{tpu_custom_call.1} parent=39 // pred_fallthru
          _
        %s522 = sand.u32 %s164, 1
        %s523 = scalar_lea.sflag [#allocation5], %s522
        %s524 = sand.u32 %s164, 1
        %s525 = smul.addr %s524, 8
        %s526 = scalar_lea.vmem [#allocation9], %s525
        // Predicated region
        $region61: #{tpu_custom_call.1} parent=39 // pred_check
          %p527 = pneg %p174
        $region62: #{tpu_custom_call.1} parent=39 // pred_check_branch
          %529 = sbr.rel (%p527) target = $region64
        $region63: #{tpu_custom_call.1} parent=39 // pred_region
          %531 = vsyncadd %s523, 0
          %s532 = smul.addr %s29, 2
          %s533 = smul.addr %s532, 4
          %s534 = scalar_lea.hbm %s5, %s533
          %s535 = sshll.u32 %s526, 4
          %s536 = int_to_ptr.vmem [resolvable:$true] %s535
          %s537 = sshll.u32 %s534, 4
          %s538 = int_to_ptr.hbm [resolvable:$true] %s537
          %543 = dma.vmem_to_hbm [thread:$0]  %s536, 128, %s538, %s523, 64, 64, 4
        $region64: #{tpu_custom_call.1} parent=39 // pred_fallthru
          _
      $region40: #{tpu_custom_call.1} parent=5 // pred_fallthru
        _
      %p544 = scmp.le.s32.totalorder 2, %s20
      // Predicated region
      $region65: #{tpu_custom_call.1} parent=5 // pred_check
        %p545 = pneg %p544
      $region66: #{tpu_custom_call.1} parent=5 // pred_check_branch
        %547 = sbr.rel (%p545) target = $region68
      $region67: #{tpu_custom_call.1} parent=5 // pred_region
        %s548 = ssub.s32 %s20, 2
        // Predicated region
        $region69: #{tpu_custom_call.1} parent=67 // pred_check
          %p549 = pneg %p180
        $region70: #{tpu_custom_call.1} parent=67 // pred_check_branch
          %551 = sbr.rel (%p549) target = $region72
        $region71: #{tpu_custom_call.1} parent=67 // pred_region
          %s552 = sand.u32 %s165, 1
          %s553 = scalar_lea.sflag [#allocation5], %s552
          %s554 = sand.u32 %s165, 1
          %s555 = smul.addr %s554, 8
          %s556 = scalar_lea.vmem [#allocation9], %s555
          %558 = dma.done %s553, 128
        $region72: #{tpu_custom_call.1} parent=67 // pred_fallthru
          _
      $region68: #{tpu_custom_call.1} parent=5 // pred_fallthru
        _
    $region6: #{tpu_custom_call.1} parent=1 // loop_footer
      %s24 = sadd.s32 1, %s20
    $region7: #{tpu_custom_call.1} parent=1 // loop_footer_branch
      %19 = sbr.rel target = $region3
    $region8: #{tpu_custom_call.1} parent=1 // loop_exit
      _
    %559 = vsyncpa [#allocation4], 1
    %s560 = scalar_lea.sflag [#allocation4], 1
    %561 = vsyncpa %s560, 1
    %562 = vsyncpa [#allocation7], 1
    %s563 = scalar_lea.sflag [#allocation7], 1
    %564 = vsyncpa %s563, 1
    %565 = vsyncpa [#allocation5], 1
    %s566 = scalar_lea.sflag [#allocation5], 1
    %567 = vsyncpa %s566, 1

</llo_original>
